<compile_context>
chip_gen: v6e
topology: v6e:2x2x1
jax: 0.10.0
libtpu: 0.0.40
codegen_flags: <defaults>
</compile_context>

<pallas_src>
import jax
import jax.numpy as jnp
from jax.experimental import pallas as pl
from jax.experimental.pallas import tpu as pltpu


def _round_up(n, m=128):
    return ((n + m - 1) // m) * m


# ---------------------------------------------------------------------------
# Fused kernel body: grid = (batch_tiles, num_layers)
#   refs: x, w0, w_rest(l), b(l), bn(l), w_fc, b_fc, out, h_scratch
# ---------------------------------------------------------------------------
def _make_kernel(gp, num_layers):
    """gp = padded lane width of one gate block (>= 2*hidden, multiple of 128)."""

    def kernel(x_ref, w0_ref, wr_ref, b_ref, bn_ref, wfc_ref, bfc_ref,
               out_ref, h_ref):
        l = pl.program_id(1)

        def gru_step(inp_f32, w_bf16):
            # bf16 MXU inputs, f32 accumulate; elementwise math in f32.
            gates = jnp.dot(inp_f32.astype(jnp.bfloat16), w_bf16,
                            preferred_element_type=jnp.float32) + b_ref[...]
            r = jax.nn.sigmoid(gates[:, 0 * gp:1 * gp])
            z = jax.nn.sigmoid(gates[:, 1 * gp:2 * gp])
            n = jnp.tanh(gates[:, 2 * gp:3 * gp] + r * bn_ref[...])
            return (1.0 - z) * n          # already [h_fwd | h_bwd | zeros]

        @pl.when(l == 0)
        def _():
            h_ref[...] = gru_step(x_ref[...], w0_ref[...])

        @pl.when(l > 0)
        def _():
            h_ref[...] = gru_step(h_ref[...], wr_ref[...])

        @pl.when(l == num_layers - 1)
        def _():
            out_ref[...] = (
                jnp.dot(h_ref[...].astype(jnp.bfloat16), wfc_ref[...],
                        preferred_element_type=jnp.float32) + bfc_ref[...])

    return kernel


# ---------------------------------------------------------------------------
# Wrapper: one pallas_call for the whole forward
# ---------------------------------------------------------------------------
def bigru_forward(x, packed, *, batch_tile=256):
    B = x.shape[0]
    gp, cp, xp = packed["gp"], packed["cp"], packed["xp"]
    L = packed["num_layers"]
    C = packed["num_classes"]

    # Batch tile: 256 matches the 2x256 MXU pass height on v6e/v7x (128 would
    # match v5e); tiny batches round up to the 8-sublane minimum instead.
    bt = min(batch_tile, _round_up(B, 8))
    b_pad = _round_up(B, bt)
    num_bt = b_pad // bt

    # Lane/sublane-pad the activations (needed for tiling; padded rows are
    # sliced off below and padded lanes hit zero weight rows).
    x_p = jnp.zeros((b_pad, xp), jnp.float32)
    x_p = x_p.at[:B, :x.shape[1]].set(x.astype(jnp.float32))

    # Scoped-VMEM budget (resident weights + double-buffered streams + scratch)
    # with generous headroom.  v7x has only 64 MiB physical VMEM; at realistic
    # hidden sizes the streamed design keeps residency ~2 layers of weights.
    resident = (xp * 3 * gp + gp * cp) * 2 + cp * 4            # w0, w_fc, b_fc (bf16/f32)
    per_layer = gp * 3 * gp * 2 + (3 * gp + gp) * 4            # streamed w_rest + biases
    tiled = bt * (xp + cp) * 4                                 # x tile + out tile
    scratch = bt * gp * 4                                      # h scratch
    vmem_limit = min(int(2 * (resident + per_layer + tiled) * 1.5)
                     + scratch + (8 << 20), 120 << 20)

    flops = int(2 * b_pad * (xp * 3 * gp + (L - 1) * gp * 3 * gp + gp * cp))
    transcendentals = int(b_pad * L * 3 * gp)
    bytes_accessed = int(
        num_bt * ((xp * 3 * gp + (L - 1) * gp * 3 * gp + gp * cp) * 2
                  + L * 4 * gp * 4 + cp * 4)
        + b_pad * (xp + cp) * 4)

    grid_spec = pltpu.PrefetchScalarGridSpec(
        num_scalar_prefetch=0,
        grid=(num_bt, L),
        in_specs=[
            # x tile: constant across the layer axis -> DMA'd once per batch tile
            pl.BlockSpec((bt, xp), lambda bi, l: (bi, 0)),
            # layer-0 weight (K = padded input_size), resident (constant index)
            pl.BlockSpec((xp, 3 * gp), lambda bi, l: (0, 0)),
            # layers 1..L-1 weights, streamed/double-buffered along the layer axis
            pl.BlockSpec((None, gp, 3 * gp),
                         lambda bi, l: (jnp.maximum(l - 1, 0), 0, 0)),
            # fused r/z biases (+ input n bias), streamed per layer
            pl.BlockSpec((None, 1, 3 * gp), lambda bi, l: (l, 0, 0)),
            # b_hn (multiplied by r), streamed per layer
            pl.BlockSpec((None, 1, gp), lambda bi, l: (l, 0, 0)),
            # fc weight / bias, resident
            pl.BlockSpec((gp, cp), lambda bi, l: (0, 0)),
            pl.BlockSpec((1, cp), lambda bi, l: (0, 0)),
        ],
        out_specs=pl.BlockSpec((bt, cp), lambda bi, l: (bi, 0)),
        scratch_shapes=[pltpu.VMEM((bt, gp), jnp.float32)],   # h across layers
    )

    out_pad = pl.pallas_call(
        _make_kernel(gp, L),
        out_shape=jax.ShapeDtypeStruct((b_pad, cp), jnp.float32),
        grid_spec=grid_spec,
        compiler_params=pltpu.CompilerParams(
            dimension_semantics=("parallel", "arbitrary"),
            vmem_limit_bytes=vmem_limit),
        cost_estimate=pl.CostEstimate(flops=flops,
                                      transcendentals=transcendentals,
                                      bytes_accessed=bytes_accessed),
    )(x_p, packed["w0"], packed["w_rest"], packed["b_all"], packed["bn_all"],
      packed["w_fc"], packed["b_fc"])

    # Lane-dense (128-wide) store in-kernel; slice to the logical shape here.
    # TODO(synk): if the consumer can take the padded (b_pad, cp) slab, fuse
    # this slice into the next op instead.
    return out_pad[:B, :C]


# ---------------------------------------------------------------------------
# Parameter init in PyTorch layout (W_hh omitted -- dead since h0 == 0)
# ---------------------------------------------------------------------------
def init_raw_params(key, input_size, hidden, num_layers, num_classes):
    k = key
    scale = 1.0 / (hidden ** 0.5)
    gru = []
    in_dim = input_size
    for _ in range(num_layers):
        dirs = []
        for _ in range(2):  # forward, backward
            k, k1, k2, k3 = jax.random.split(k, 4)
            w_ih = jax.random.uniform(k1, (3 * hidden, in_dim), jnp.float32,
                                      -scale, scale)
            b_ih = jax.random.uniform(k2, (3 * hidden,), jnp.float32,
                                      -scale, scale)
            b_hh = jax.random.uniform(k3, (3 * hidden,), jnp.float32,
                                      -scale, scale)
            dirs.append((w_ih, b_ih, b_hh))
        gru.append(tuple(dirs))
        in_dim = 2 * hidden
    k, k1, k2 = jax.random.split(k, 3)
    s_fc = 1.0 / ((2 * hidden) ** 0.5)
    w_fc = jax.random.uniform(k1, (num_classes, 2 * hidden), jnp.float32,
                              -s_fc, s_fc)
    b_fc = jax.random.uniform(k2, (num_classes,), jnp.float32, -s_fc, s_fc)
    return {"hidden": hidden, "num_classes": num_classes, "gru": gru,
            "w_fc": w_fc, "b_fc": b_fc}


# ---------------------------------------------------------------------------
# Pack PyTorch-layout params into the fused, lane-padded, bf16 kernel layout
# ---------------------------------------------------------------------------
def pack_params(raw, input_size):
    H = raw["hidden"]
    C = raw["num_classes"]
    L = len(raw["gru"])
    # gp stays exactly round_up(2H, 128): the kernel is weight-bandwidth bound,
    # so padding further (e.g. to a 256-wide MXU pass) only adds dead bytes.
    gp = _round_up(2 * H)
    cp = _round_up(C)
    xp = _round_up(input_size)

    def pack_layer(layer, in_dim_pad, in_dim_raw):
        (w_f, bi_f, bh_f), (w_b, bi_b, bh_b) = layer
        w = jnp.zeros((in_dim_pad, 3 * gp), jnp.float32)
        b = jnp.zeros((1, 3 * gp), jnp.float32)
        bn = jnp.zeros((1, gp), jnp.float32)
        for g in range(3):  # gate order: r, z, n
            rows = slice(g * H, (g + 1) * H)
            w = w.at[:in_dim_raw, g * gp:g * gp + H].set(w_f[rows, :].T)
            w = w.at[:in_dim_raw, g * gp + H:g * gp + 2 * H].set(w_b[rows, :].T)
            if g < 2:  # r, z: fold b_ih + b_hh
                b = b.at[0, g * gp:g * gp + H].set(bi_f[rows] + bh_f[rows])
                b = b.at[0, g * gp + H:g * gp + 2 * H].set(bi_b[rows] + bh_b[rows])
            else:      # n: keep b_hn separate (gets multiplied by r)
                b = b.at[0, g * gp:g * gp + H].set(bi_f[rows])
                b = b.at[0, g * gp + H:g * gp + 2 * H].set(bi_b[rows])
        bn = bn.at[0, :H].set(bh_f[2 * H:3 * H])
        bn = bn.at[0, H:2 * H].set(bh_b[2 * H:3 * H])
        return w, b, bn

    w0, b0, bn0 = pack_layer(raw["gru"][0], xp, input_size)
    rest_w, rest_b, rest_bn = [], [], []
    for layer in raw["gru"][1:]:
        w, b, bn = pack_layer(layer, gp, 2 * H)
        rest_w.append(w), rest_b.append(b), rest_bn.append(bn)

    if rest_w:
        w_rest = jnp.stack(rest_w)                 # (L-1, gp, 3*gp)
    else:
        w_rest = jnp.zeros((1, gp, 3 * gp), jnp.float32)   # dummy, never read
    b_all = jnp.stack([b0] + rest_b)               # (L, 1, 3*gp)
    bn_all = jnp.stack([bn0] + rest_bn)            # (L, 1, gp)

    w_fc = jnp.zeros((gp, cp), jnp.float32).at[:2 * H, :C].set(raw["w_fc"].T)
    b_fc = jnp.zeros((1, cp), jnp.float32).at[0, :C].set(raw["b_fc"])

    # bf16 weight storage (pad columns stay exactly zero); biases stay f32.
    # TODO(synk): on v7x the per-layer weights could be fp8 (per-gate-block
    # scales, f32 accumulate) for another 2x on weight bandwidth.
    return {"w0": w0.astype(jnp.bfloat16),
            "w_rest": w_rest.astype(jnp.bfloat16),
            "b_all": b_all, "bn_all": bn_all,
            "w_fc": w_fc.astype(jnp.bfloat16), "b_fc": b_fc,
            "gp": gp, "cp": cp, "xp": xp,
            "num_layers": L, "num_classes": C, "hidden": H}


# ---------------------------------------------------------------------------
# Pure-JAX references (PyTorch GRU equations with h0 = 0, seq_len = 1)
# ---------------------------------------------------------------------------
def ref_forward(x, raw, *, bf16=False):
    """bf16=True emulates the kernel's mixed precision (bf16 in, f32 acc)."""
    H = raw["hidden"]

    def mm(a, b):
        if bf16:
            return jnp.dot(a.astype(jnp.bfloat16), b.astype(jnp.bfloat16),
                           preferred_element_type=jnp.float32)
        return jnp.dot(a, b, preferred_element_type=jnp.float32)

    h = x.astype(jnp.float32)
    for layer in raw["gru"]:
        outs = []
        for (w_ih, b_ih, b_hh) in layer:
            gi = mm(h, w_ih.T) + b_ih
            r = jax.nn.sigmoid(gi[:, 0 * H:1 * H] + b_hh[0 * H:1 * H])
            z = jax.nn.sigmoid(gi[:, 1 * H:2 * H] + b_hh[1 * H:2 * H])
            n = jnp.tanh(gi[:, 2 * H:3 * H] + r * b_hh[2 * H:3 * H])
            outs.append((1.0 - z) * n)
        h = jnp.concatenate(outs, axis=-1)
    # other_dropout p=0.0 -> identity
    return mm(h, raw["w_fc"].T) + raw["b_fc"]


if __name__ == "__main__":
    batch, input_size = 2, 16
    hidden, num_layers, num_classes = 32, 2, 8

    key = jax.random.PRNGKey(0)
    kx, kp = jax.random.split(key)
    x = jax.random.normal(kx, (batch, input_size), jnp.float32)

    raw = init_raw_params(kp, input_size, hidden, num_layers, num_classes)
    packed = pack_params(raw, input_size)

    out = bigru_forward(x, packed)
    out = jax.block_until_ready(out)
    assert out.shape == (batch, num_classes), out.shape

    # Check against the exact-f32 PyTorch math (loose: bf16 weights/activations)
    ref_f32 = ref_forward(x, raw, bf16=False)
    err_f32 = float(jnp.max(jnp.abs(out - ref_f32)))
    assert jnp.allclose(out, ref_f32, atol=3e-2, rtol=3e-2), err_f32

    # Check against a bf16-emulated reference (tight: same precision path)
    ref_bf = ref_forward(x, raw, bf16=True)
    err_bf = float(jnp.max(jnp.abs(out - ref_bf)))
    assert jnp.allclose(out, ref_bf, atol=5e-3, rtol=5e-3), err_bf

    print("KERNEL_OK")
</pallas_src>

<mosaic_0001>
module attributes {stable_mosaic.version = 11 : i64} {
  func.func @kernel(%arg0: i32, %arg1: i32, %arg2: memref<8x128xf32, #tpu.memory_space<vmem>>, %arg3: memref<128x384xbf16, #tpu.memory_space<vmem>>, %arg4: memref<1x128x384xbf16, #tpu.memory_space<vmem>>, %arg5: memref<1x1x384xf32, #tpu.memory_space<vmem>>, %arg6: memref<1x1x128xf32, #tpu.memory_space<vmem>>, %arg7: memref<128x128xbf16, #tpu.memory_space<vmem>>, %arg8: memref<1x128xf32, #tpu.memory_space<vmem>>, %arg9: memref<8x128xf32, #tpu.memory_space<vmem>>, %arg10: memref<8x128xf32, #tpu.memory_space<vmem>>) attributes {dimension_semantics = [#tpu.dimension_semantics<parallel>, #tpu.dimension_semantics<arbitrary>], iteration_bounds = array<i64: 1, 2>, scalar_prefetch = 0 : i64, scratch_operands = 1 : i64, tpu.core_type = #tpu.core_type<tc>, window_params = [{transform_indices = @transform_0, window_bounds = array<i64: 8, 128>}, {pipeline_mode = #tpu.pipeline_mode<synchronous>, transform_indices = @transform_1, window_bounds = array<i64: 128, 384>}, {transform_indices = @transform_2, window_bounds = array<i64: 1, 128, 384>}, {transform_indices = @transform_3, window_bounds = array<i64: 1, 1, 384>}, {transform_indices = @transform_4, window_bounds = array<i64: 1, 1, 128>}, {pipeline_mode = #tpu.pipeline_mode<synchronous>, transform_indices = @transform_5, window_bounds = array<i64: 128, 128>}, {pipeline_mode = #tpu.pipeline_mode<synchronous>, transform_indices = @transform_6, window_bounds = array<i64: 1, 128>}, {transform_indices = @transform_7, window_bounds = array<i64: 8, 128>}]} {
    %c0_i32 = arith.constant 0 : i32
    %0 = arith.cmpi eq, %arg1, %c0_i32 : i32
    %1 = arith.extui %0 : i1 to i32
    %c0_i32_0 = arith.constant 0 : i32
    %2 = arith.cmpi ne, %1, %c0_i32_0 : i32
    scf.if %2 {
      %c0 = arith.constant 0 : index
      %c0_4 = arith.constant 0 : index
      %9 = vector.load %arg2[%c0, %c0_4] : memref<8x128xf32, #tpu.memory_space<vmem>>, vector<8x128xf32>
      %c0_5 = arith.constant 0 : index
      %c0_6 = arith.constant 0 : index
      %10 = vector.load %arg3[%c0_5, %c0_6] : memref<128x384xbf16, #tpu.memory_space<vmem>>, vector<128x384xbf16>
      %11 = arith.truncf %9 : vector<8x128xf32> to vector<8x128xbf16>
      %cst = arith.constant dense<0.000000e+00> : vector<8x384xf32>
      %12 = tpu.matmul %11, %10, %cst {dimension_numbers = #tpu.dot_dimension_numbers<[1], [0], [0], [1], [0, 0, 1, 1], [], []>} : vector<8x128xbf16>, vector<128x384xbf16>, vector<8x384xf32> -> vector<8x384xf32>
      %c0_7 = arith.constant 0 : index
      %c0_8 = arith.constant 0 : index
      %c0_9 = arith.constant 0 : index
      %13 = vector.load %arg5[%c0_7, %c0_8, %c0_9] : memref<1x1x384xf32, #tpu.memory_space<vmem>>, vector<1x1x384xf32>
      %14 = vector.shape_cast %13 : vector<1x1x384xf32> to vector<1x384xf32>
      %15 = vector.broadcast %14 : vector<1x384xf32> to vector<8x384xf32>
      %16 = arith.addf %12, %15 : vector<8x384xf32>
      %17 = vector.extract_strided_slice %16 {offsets = [0, 0], sizes = [8, 128], strides = [1, 1]} : vector<8x384xf32> to vector<8x128xf32>
      %18 = arith.negf %17 : vector<8x128xf32>
      %19 = math.exp %18 : vector<8x128xf32>
      %cst_10 = arith.constant 1.000000e+00 : f32
      %20 = vector.broadcast %cst_10 : f32 to vector<8x128xf32>
      %21 = arith.addf %20, %19 : vector<8x128xf32>
      %22 = arith.divf %20, %21 : vector<8x128xf32>
      %23 = vector.extract_strided_slice %16 {offsets = [0, 128], sizes = [8, 128], strides = [1, 1]} : vector<8x384xf32> to vector<8x128xf32>
      %24 = arith.negf %23 : vector<8x128xf32>
      %25 = math.exp %24 : vector<8x128xf32>
      %cst_11 = arith.constant 1.000000e+00 : f32
      %26 = vector.broadcast %cst_11 : f32 to vector<8x128xf32>
      %27 = arith.addf %26, %25 : vector<8x128xf32>
      %28 = arith.divf %26, %27 : vector<8x128xf32>
      %29 = vector.extract_strided_slice %16 {offsets = [0, 256], sizes = [8, 128], strides = [1, 1]} : vector<8x384xf32> to vector<8x128xf32>
      %c0_12 = arith.constant 0 : index
      %c0_13 = arith.constant 0 : index
      %c0_14 = arith.constant 0 : index
      %30 = vector.load %arg6[%c0_12, %c0_13, %c0_14] : memref<1x1x128xf32, #tpu.memory_space<vmem>>, vector<1x1x128xf32>
      %31 = vector.shape_cast %30 : vector<1x1x128xf32> to vector<1x128xf32>
      %32 = vector.broadcast %31 : vector<1x128xf32> to vector<8x128xf32>
      %33 = arith.mulf %22, %32 : vector<8x128xf32>
      %34 = arith.addf %29, %33 : vector<8x128xf32>
      %35 = math.tanh %34 : vector<8x128xf32>
      %cst_15 = arith.constant 1.000000e+00 : f32
      %36 = vector.broadcast %cst_15 : f32 to vector<8x128xf32>
      %37 = arith.subf %36, %28 : vector<8x128xf32>
      %38 = arith.mulf %37, %35 : vector<8x128xf32>
      %c0_16 = arith.constant 0 : index
      %c0_17 = arith.constant 0 : index
      %39 = vector.load %arg10[%c0_16, %c0_17] : memref<8x128xf32, #tpu.memory_space<vmem>>, vector<8x128xf32>
      tpu.vector_store %arg10[%c0_16, %c0_17], %38 {strides = array<i32>} : memref<8x128xf32, #tpu.memory_space<vmem>>, vector<8x128xf32>,
    } else {
    }
    %c0_i32_1 = arith.constant 0 : i32
    %3 = arith.cmpi sgt, %arg1, %c0_i32_1 : i32
    %4 = arith.extui %3 : i1 to i32
    %c0_i32_2 = arith.constant 0 : i32
    %5 = arith.cmpi ne, %4, %c0_i32_2 : i32
    scf.if %5 {
      %c0 = arith.constant 0 : index
      %c0_4 = arith.constant 0 : index
      %9 = vector.load %arg10[%c0, %c0_4] : memref<8x128xf32, #tpu.memory_space<vmem>>, vector<8x128xf32>
      %c0_5 = arith.constant 0 : index
      %c0_6 = arith.constant 0 : index
      %c0_7 = arith.constant 0 : index
      %10 = vector.load %arg4[%c0_5, %c0_6, %c0_7] : memref<1x128x384xbf16, #tpu.memory_space<vmem>>, vector<1x128x384xbf16>
      %11 = vector.shape_cast %10 : vector<1x128x384xbf16> to vector<128x384xbf16>
      %12 = arith.truncf %9 : vector<8x128xf32> to vector<8x128xbf16>
      %cst = arith.constant dense<0.000000e+00> : vector<8x384xf32>
      %13 = tpu.matmul %12, %11, %cst {dimension_numbers = #tpu.dot_dimension_numbers<[1], [0], [0], [1], [0, 0, 1, 1], [], []>} : vector<8x128xbf16>, vector<128x384xbf16>, vector<8x384xf32> -> vector<8x384xf32>
      %c0_8 = arith.constant 0 : index
      %c0_9 = arith.constant 0 : index
      %c0_10 = arith.constant 0 : index
      %14 = vector.load %arg5[%c0_8, %c0_9, %c0_10] : memref<1x1x384xf32, #tpu.memory_space<vmem>>, vector<1x1x384xf32>
      %15 = vector.shape_cast %14 : vector<1x1x384xf32> to vector<1x384xf32>
      %16 = vector.broadcast %15 : vector<1x384xf32> to vector<8x384xf32>
      %17 = arith.addf %13, %16 : vector<8x384xf32>
      %18 = vector.extract_strided_slice %17 {offsets = [0, 0], sizes = [8, 128], strides = [1, 1]} : vector<8x384xf32> to vector<8x128xf32>
      %19 = arith.negf %18 : vector<8x128xf32>
      %20 = math.exp %19 : vector<8x128xf32>
      %cst_11 = arith.constant 1.000000e+00 : f32
      %21 = vector.broadcast %cst_11 : f32 to vector<8x128xf32>
      %22 = arith.addf %21, %20 : vector<8x128xf32>
      %23 = arith.divf %21, %22 : vector<8x128xf32>
      %24 = vector.extract_strided_slice %17 {offsets = [0, 128], sizes = [8, 128], strides = [1, 1]} : vector<8x384xf32> to vector<8x128xf32>
      %25 = arith.negf %24 : vector<8x128xf32>
      %26 = math.exp %25 : vector<8x128xf32>
      %cst_12 = arith.constant 1.000000e+00 : f32
      %27 = vector.broadcast %cst_12 : f32 to vector<8x128xf32>
      %28 = arith.addf %27, %26 : vector<8x128xf32>
      %29 = arith.divf %27, %28 : vector<8x128xf32>
      %30 = vector.extract_strided_slice %17 {offsets = [0, 256], sizes = [8, 128], strides = [1, 1]} : vector<8x384xf32> to vector<8x128xf32>
      %c0_13 = arith.constant 0 : index
      %c0_14 = arith.constant 0 : index
      %c0_15 = arith.constant 0 : index
      %31 = vector.load %arg6[%c0_13, %c0_14, %c0_15] : memref<1x1x128xf32, #tpu.memory_space<vmem>>, vector<1x1x128xf32>
      %32 = vector.shape_cast %31 : vector<1x1x128xf32> to vector<1x128xf32>
      %33 = vector.broadcast %32 : vector<1x128xf32> to vector<8x128xf32>
      %34 = arith.mulf %23, %33 : vector<8x128xf32>
      %35 = arith.addf %30, %34 : vector<8x128xf32>
      %36 = math.tanh %35 : vector<8x128xf32>
      %cst_16 = arith.constant 1.000000e+00 : f32
      %37 = vector.broadcast %cst_16 : f32 to vector<8x128xf32>
      %38 = arith.subf %37, %29 : vector<8x128xf32>
      %39 = arith.mulf %38, %36 : vector<8x128xf32>
      %c0_17 = arith.constant 0 : index
      %c0_18 = arith.constant 0 : index
      %40 = vector.load %arg10[%c0_17, %c0_18] : memref<8x128xf32, #tpu.memory_space<vmem>>, vector<8x128xf32>
      tpu.vector_store %arg10[%c0_17, %c0_18], %39 {strides = array<i32>} : memref<8x128xf32, #tpu.memory_space<vmem>>, vector<8x128xf32>,
    } else {
    }
    %c1_i32 = arith.constant 1 : i32
    %6 = arith.cmpi eq, %arg1, %c1_i32 : i32
    %7 = arith.extui %6 : i1 to i32
    %c0_i32_3 = arith.constant 0 : i32
    %8 = arith.cmpi ne, %7, %c0_i32_3 : i32
    scf.if %8 {
      %c0 = arith.constant 0 : index
      %c0_4 = arith.constant 0 : index
      %9 = vector.load %arg10[%c0, %c0_4] : memref<8x128xf32, #tpu.memory_space<vmem>>, vector<8x128xf32>
      %10 = arith.truncf %9 : vector<8x128xf32> to vector<8x128xbf16>
      %c0_5 = arith.constant 0 : index
      %c0_6 = arith.constant 0 : index
      %11 = vector.load %arg7[%c0_5, %c0_6] : memref<128x128xbf16, #tpu.memory_space<vmem>>, vector<128x128xbf16>
      %cst = arith.constant dense<0.000000e+00> : vector<8x128xf32>
      %12 = tpu.matmul %10, %11, %cst {dimension_numbers = #tpu.dot_dimension_numbers<[1], [0], [0], [1], [0, 0, 1, 1], [], []>} : vector<8x128xbf16>, vector<128x128xbf16>, vector<8x128xf32> -> vector<8x128xf32>
      %c0_7 = arith.constant 0 : index
      %c0_8 = arith.constant 0 : index
      %13 = vector.load %arg8[%c0_7, %c0_8] : memref<1x128xf32, #tpu.memory_space<vmem>>, vector<1x128xf32>
      %14 = vector.broadcast %13 : vector<1x128xf32> to vector<8x128xf32>
      %15 = arith.addf %12, %14 : vector<8x128xf32>
      %c0_9 = arith.constant 0 : index
      %c0_10 = arith.constant 0 : index
      %16 = vector.load %arg9[%c0_9, %c0_10] : memref<8x128xf32, #tpu.memory_space<vmem>>, vector<8x128xf32>
      tpu.vector_store %arg9[%c0_9, %c0_10], %15 {strides = array<i32>} : memref<8x128xf32, #tpu.memory_space<vmem>>, vector<8x128xf32>,
    } else {
    }
    return
  }
  func.func @transform_0(%arg0: i32, %arg1: i32) -> (i32, i32) {
    %c0_i32 = arith.constant 0 : i32
    %c0_i32_0 = arith.constant 0 : i32
    return %arg0, %c0_i32 : i32, i32
  }
  func.func @transform_1(%arg0: i32, %arg1: i32) -> (i32, i32) {
    %c0_i32 = arith.constant 0 : i32
    %c0_i32_0 = arith.constant 0 : i32
    %c0_i32_1 = arith.constant 0 : i32
    return %c0_i32, %c0_i32_0 : i32, i32
  }
  func.func @transform_2(%arg0: i32, %arg1: i32) -> (i32, i32, i32) {
    %c1_i32 = arith.constant 1 : i32
    %0 = arith.subi %arg1, %c1_i32 : i32
    %c0_i32 = arith.constant 0 : i32
    %1 = arith.maxsi %0, %c0_i32 : i32
    %c0_i32_0 = arith.constant 0 : i32
    %c0_i32_1 = arith.constant 0 : i32
    %c0_i32_2 = arith.constant 0 : i32
    return %1, %c0_i32_0, %c0_i32_1 : i32, i32, i32
  }
  func.func @transform_3(%arg0: i32, %arg1: i32) -> (i32, i32, i32) {
    %c0_i32 = arith.constant 0 : i32
    %c0_i32_0 = arith.constant 0 : i32
    %c0_i32_1 = arith.constant 0 : i32
    return %arg1, %c0_i32, %c0_i32_0 : i32, i32, i32
  }
  func.func @transform_4(%arg0: i32, %arg1: i32) -> (i32, i32, i32) {
    %c0_i32 = arith.constant 0 : i32
    %c0_i32_0 = arith.constant 0 : i32
    %c0_i32_1 = arith.constant 0 : i32
    return %arg1, %c0_i32, %c0_i32_0 : i32, i32, i32
  }
  func.func @transform_5(%arg0: i32, %arg1: i32) -> (i32, i32) {
    %c0_i32 = arith.constant 0 : i32
    %c0_i32_0 = arith.constant 0 : i32
    %c0_i32_1 = arith.constant 0 : i32
    return %c0_i32, %c0_i32_0 : i32, i32
  }
  func.func @transform_6(%arg0: i32, %arg1: i32) -> (i32, i32) {
    %c0_i32 = arith.constant 0 : i32
    %c0_i32_0 = arith.constant 0 : i32
    %c0_i32_1 = arith.constant 0 : i32
    return %c0_i32, %c0_i32_0 : i32, i32
  }
  func.func @transform_7(%arg0: i32, %arg1: i32) -> (i32, i32) {
    %c0_i32 = arith.constant 0 : i32
    %c0_i32_0 = arith.constant 0 : i32
    return %arg0, %c0_i32 : i32, i32
  }
}

</mosaic_0001>

<llo_original>
// kernel: tpu_custom_call.1
$region0: #{tpu_custom_call.1}
  #allocation0 [shape = 'u32[]', space=smem, size = 0x4, offset = 0x4, fixed_abs, tag = 'smem constant byte address 0x4 - core index']
  #allocation1 [shape = 'u32[144,128]{1,0:T(1,128)}', space=vmem, size = 0x12000, scoped, tag = 'internal scratch']
  #allocation2 [shape = 'f32[8,128]{1,0:T(8,128)}', space=vmem, size = 0x1000, scoped, tag = 'scratch operand']
  %s0 = inlined_call_operand.hbm [shape: f32[8,128], index: 0, kind: input, shape index: {}]
  %s1 = inlined_call_operand.hbm [shape: bf16[128,384], index: 1, kind: input, shape index: {}]
  %s2 = inlined_call_operand.hbm [shape: bf16[1,128,384], index: 2, kind: input, shape index: {}]
  %s3 = inlined_call_operand.hbm [shape: f32[2,1,384], index: 3, kind: input, shape index: {}]
  %s4 = inlined_call_operand.vmem [shape: f32[2,1,128], index: 4, kind: input, shape index: {}]
  %s5 = inlined_call_operand.hbm [shape: bf16[128,128], index: 5, kind: input, shape index: {}]
  %s6 = inlined_call_operand.vmem [shape: f32[1,128], index: 6, kind: input, shape index: {}]
  %s7 = inlined_call_operand.hbm [shape: f32[8,128], index: 7, kind: output, shape index: {}]
  %s8 = sld [smem:[#allocation0]]
  $region93: #{tpu_custom_call.1} parent=0
    _
  %s10 = ssub.s32 1, %s8
  %s11 = scalar_select 0, %s10, %s8
  $region1: #{tpu_custom_call.1} parent=0
    #allocation3 [shape = 'u8[4096]{0}', space=vmem, size = 0x1000, scoped, tag = 'input window, operand 0, single buffered']
    #allocation4 [shape = 's32[2]{0}', space=sflag, size = 0x8, scoped, tag = 'scoped memory for tpu_custom_call.1']
    #allocation5 [shape = 's32[2]{0}', space=sflag, size = 0x8, scoped, tag = 'scoped memory for tpu_custom_call.1']
    #allocation6 [shape = 'u8[98304]{0}', space=vmem, size = 0x18000, scoped, tag = 'input window, operand 1, single buffered']
    #allocation7 [shape = 's32[1]{0}', space=sflag, size = 0x4, scoped, tag = 'scoped memory for tpu_custom_call.1']
    #allocation8 [shape = 'u8[196608]{0}', space=vmem, size = 0x30000, scoped, tag = 'input window, operand 2']
    #allocation9 [shape = 'u8[3072]{0}', space=vmem, size = 0xc00, scoped, tag = 'input window, operand 3']
    #allocation10 [shape = 'u8[32768]{0}', space=vmem, size = 0x8000, scoped, tag = 'input window, operand 5, single buffered']
    #allocation11 [shape = 'u8[4096]{0}', space=vmem, size = 0x1000, scoped, tag = 'output window, operand 0, single buffered']
    %12 = vsyncpa [#allocation4], 0
    %13 = vsyncpa [#allocation7], 0
    %14 = vsyncpa [#allocation5], 0
    loop: start=0, step=1, limit=4
    $region2: #{tpu_custom_call.1} parent=1 // loop_pre_header
      _
    $region3: #{tpu_custom_call.1} parent=1 // loop_header
      %s16 = sphi 0, %s20
      %p17 = scmp.ge.s32.totalorder %s16, 4
      %s23 = sphi 0, %s35
      %s24 = sphi 0, %s31
      %s25 = sphi 0, %s23
      %s26 = sphi 0, %s24
      %s27 = sphi 0, %s25
      %s28 = sphi 0, %s26
      %s38 = sphi 0, %s40
      %s41 = sphi 0, %s38
      %s42 = sphi 0, %s41
      %s58 = sphi 0, %s42
      %s62 = sphi 0, %s62
      %s64 = sphi 0, %s62
      %s65 = sphi 0, %s64
      %s79 = sphi 0, %s65
      %s91 = sphi 0, %s93
      %s94 = sphi 0, %s91
      %s95 = sphi 0, %s94
      %s111 = sphi 0, %s95
      %s117 = sphi 0, %s119
      %s120 = sphi 0, %s117
      %s121 = sphi 0, %s120
      %s137 = sphi 0, %s121
      %s143 = sphi 0, %s145
      %s146 = sphi 0, %s143
      %s147 = sphi 0, %s146
      %s163 = sphi 0, %s147
      %s167 = sphi 0, %s167
      %s169 = sphi 0, %s167
      %s170 = sphi 0, %s169
      %s184 = sphi 0, %s170
      %s188 = sphi 0, %s188
      %s190 = sphi 0, %s188
      %s191 = sphi 0, %s190
      %s205 = sphi 0, %s191
      %s211 = sphi 0, %s213
      %s214 = sphi 0, %s211
      %s215 = sphi 0, %s214
      %s231 = sphi 0, %s215
    $region4: #{tpu_custom_call.1} parent=1 // loop_header_branch
      %19 = sbr.rel (%p17) target = $region8
    $region5: #{tpu_custom_call.1} parent=1 // loop_body
      %s21 = ssub.s32 %s16, 1
      %s22 = ssub.s32 %s16, 2
      %s29 = sadd.s32 1, %s24
      %p30 = scmp.ge.s32.totalorder %s29, 2
      %s31 = scalar_select %p30, 0, %s29
      %s32 = sadd.s32 1, %s23
      %s33 = scalar_select %p30, %s32, %s23
      %p34 = scmp.ge.s32.totalorder %s33, 1
      %s35 = scalar_select %p34, 0, %s33
      %s36 = ssub.s32 %s23, %s35
      %p37 = scmp.eq.s32.totalorder %s36, 0
      %s39 = sadd.s32 %s38, 1
      %s40 = scalar_select %p37, %s38, %s39
      %p43 = pneg %p37
      %p44 = scmp.eq.s32.totalorder %s16, 1
      %p45 = por %p43, %p44
      %p46 = scmp.ne.s32.totalorder %s38, %s41
      %p47 = scmp.eq.s32.totalorder %s16, 0
      %p48 = por %p46, %p47
      %p49 = scmp.ne.s32.totalorder %s38, %s41
      %p50 = scmp.eq.s32.totalorder %s21, 1
      %p51 = por %p49, %p50
      %p52 = scmp.ne.s32.totalorder %s41, %s42
      %p53 = scmp.eq.s32.totalorder %s21, 0
      %p54 = por %p52, %p53
      %p55 = scmp.ne.s32.totalorder %s41, %s42
      %p56 = scmp.eq.s32.totalorder %s22, 1
      %p57 = por %p55, %p56
      %p59 = scmp.ne.s32.totalorder %s42, %s58
      %p60 = scmp.eq.s32.totalorder %s22, 0
      %p61 = por %p59, %p60
      %s63 = sadd.s32 %s62, 1
      %p66 = scmp.eq.s32.totalorder %s16, 1
      %p67 = scmp.ne.s32.totalorder %s62, %s64
      %p68 = scmp.eq.s32.totalorder %s16, 0
      %p69 = por %p67, %p68
      %p70 = scmp.ne.s32.totalorder %s62, %s64
      %p71 = scmp.eq.s32.totalorder %s21, 1
      %p72 = por %p70, %p71
      %p73 = scmp.ne.s32.totalorder %s64, %s65
      %p74 = scmp.eq.s32.totalorder %s21, 0
      %p75 = por %p73, %p74
      %p76 = scmp.ne.s32.totalorder %s64, %s65
      %p77 = scmp.eq.s32.totalorder %s22, 1
      %p78 = por %p76, %p77
      %p80 = scmp.ne.s32.totalorder %s65, %s79
      %p81 = scmp.eq.s32.totalorder %s22, 0
      %p82 = por %p80, %p81
      %s83 = ssub.s32 %s24, 1
      %p84 = scmp.gt.s32.totalorder %s83, 0
      %s85 = scalar_select %p84, %s83, 0
      %s86 = ssub.s32 %s31, 1
      %p87 = scmp.gt.s32.totalorder %s86, 0
      %s88 = scalar_select %p87, %s86, 0
      %s89 = ssub.s32 %s85, %s88
      %p90 = scmp.eq.s32.totalorder %s89, 0
      %s92 = sadd.s32 %s91, 1
      %s93 = scalar_select %p90, %s91, %s92
      %p96 = pneg %p90
      %p97 = scmp.eq.s32.totalorder %s16, 1
      %p98 = por %p96, %p97
      %p99 = scmp.ne.s32.totalorder %s91, %s94
      %p100 = scmp.eq.s32.totalorder %s16, 0
      %p101 = por %p99, %p100
      %p102 = scmp.ne.s32.totalorder %s91, %s94
      %p103 = scmp.eq.s32.totalorder %s21, 1
      %p104 = por %p102, %p103
      %p105 = scmp.ne.s32.totalorder %s94, %s95
      %p106 = scmp.eq.s32.totalorder %s21, 0
      %p107 = por %p105, %p106
      %p108 = scmp.ne.s32.totalorder %s94, %s95
      %p109 = scmp.eq.s32.totalorder %s22, 1
      %p110 = por %p108, %p109
      %p112 = scmp.ne.s32.totalorder %s95, %s111
      %p113 = scmp.eq.s32.totalorder %s22, 0
      %p114 = por %p112, %p113
      %s115 = ssub.s32 %s24, %s31
      %p116 = scmp.eq.s32.totalorder %s115, 0
      %s118 = sadd.s32 %s117, 1
      %s119 = scalar_select %p116, %s117, %s118
      %p122 = pneg %p116
      %p123 = scmp.eq.s32.totalorder %s16, 1
      %p124 = por %p122, %p123
      %p125 = scmp.ne.s32.totalorder %s117, %s120
      %p126 = scmp.eq.s32.totalorder %s16, 0
      %p127 = por %p125, %p126
      %p128 = scmp.ne.s32.totalorder %s117, %s120
      %p129 = scmp.eq.s32.totalorder %s21, 1
      %p130 = por %p128, %p129
      %p131 = scmp.ne.s32.totalorder %s120, %s121
      %p132 = scmp.eq.s32.totalorder %s21, 0
      %p133 = por %p131, %p132
      %p134 = scmp.ne.s32.totalorder %s120, %s121
      %p135 = scmp.eq.s32.totalorder %s22, 1
      %p136 = por %p134, %p135
      %p138 = scmp.ne.s32.totalorder %s121, %s137
      %p139 = scmp.eq.s32.totalorder %s22, 0
      %p140 = por %p138, %p139
      %s141 = ssub.s32 %s24, %s31
      %p142 = scmp.eq.s32.totalorder %s141, 0
      %s144 = sadd.s32 %s143, 1
      %s145 = scalar_select %p142, %s143, %s144
      %p148 = pneg %p142
      %p149 = scmp.eq.s32.totalorder %s16, 1
      %p150 = por %p148, %p149
      %p151 = scmp.ne.s32.totalorder %s143, %s146
      %p152 = scmp.eq.s32.totalorder %s16, 0
      %p153 = por %p151, %p152
      %p154 = scmp.ne.s32.totalorder %s143, %s146
      %p155 = scmp.eq.s32.totalorder %s21, 1
      %p156 = por %p154, %p155
      %p157 = scmp.ne.s32.totalorder %s146, %s147
      %p158 = scmp.eq.s32.totalorder %s21, 0
      %p159 = por %p157, %p158
      %p160 = scmp.ne.s32.totalorder %s146, %s147
      %p161 = scmp.eq.s32.totalorder %s22, 1
      %p162 = por %p160, %p161
      %p164 = scmp.ne.s32.totalorder %s147, %s163
      %p165 = scmp.eq.s32.totalorder %s22, 0
      %p166 = por %p164, %p165
      %s168 = sadd.s32 %s167, 1
      %p171 = scmp.eq.s32.totalorder %s16, 1
      %p172 = scmp.ne.s32.totalorder %s167, %s169
      %p173 = scmp.eq.s32.totalorder %s16, 0
      %p174 = por %p172, %p173
      %p175 = scmp.ne.s32.totalorder %s167, %s169
      %p176 = scmp.eq.s32.totalorder %s21, 1
      %p177 = por %p175, %p176
      %p178 = scmp.ne.s32.totalorder %s169, %s170
      %p179 = scmp.eq.s32.totalorder %s21, 0
      %p180 = por %p178, %p179
      %p181 = scmp.ne.s32.totalorder %s169, %s170
      %p182 = scmp.eq.s32.totalorder %s22, 1
      %p183 = por %p181, %p182
      %p185 = scmp.ne.s32.totalorder %s170, %s184
      %p186 = scmp.eq.s32.totalorder %s22, 0
      %p187 = por %p185, %p186
      %s189 = sadd.s32 %s188, 1
      %p192 = scmp.eq.s32.totalorder %s16, 1
      %p193 = scmp.ne.s32.totalorder %s188, %s190
      %p194 = scmp.eq.s32.totalorder %s16, 0
      %p195 = por %p193, %p194
      %p196 = scmp.ne.s32.totalorder %s188, %s190
      %p197 = scmp.eq.s32.totalorder %s21, 1
      %p198 = por %p196, %p197
      %p199 = scmp.ne.s32.totalorder %s190, %s191
      %p200 = scmp.eq.s32.totalorder %s21, 0
      %p201 = por %p199, %p200
      %p202 = scmp.ne.s32.totalorder %s190, %s191
      %p203 = scmp.eq.s32.totalorder %s22, 1
      %p204 = por %p202, %p203
      %p206 = scmp.ne.s32.totalorder %s191, %s205
      %p207 = scmp.eq.s32.totalorder %s22, 0
      %p208 = por %p206, %p207
      %s209 = ssub.s32 %s23, %s35
      %p210 = scmp.eq.s32.totalorder %s209, 0
      %s212 = sadd.s32 %s211, 1
      %s213 = scalar_select %p210, %s211, %s212
      %p216 = pneg %p210
      %p217 = scmp.eq.s32.totalorder %s16, 1
      %p218 = por %p216, %p217
      %p219 = scmp.ne.s32.totalorder %s211, %s214
      %p220 = scmp.eq.s32.totalorder %s16, 0
      %p221 = por %p219, %p220
      %p222 = scmp.ne.s32.totalorder %s211, %s214
      %p223 = scmp.eq.s32.totalorder %s21, 1
      %p224 = por %p222, %p223
      %p225 = scmp.ne.s32.totalorder %s214, %s215
      %p226 = scmp.eq.s32.totalorder %s21, 0
      %p227 = por %p225, %p226
      %p228 = scmp.ne.s32.totalorder %s214, %s215
      %p229 = scmp.eq.s32.totalorder %s22, 1
      %p230 = por %p228, %p229
      %p232 = scmp.ne.s32.totalorder %s215, %s231
      %p233 = scmp.eq.s32.totalorder %s22, 0
      %p234 = por %p232, %p233
      %p235 = scmp.le.s32.totalorder 1, %s16
      %p236 = scmp.lt.s32.totalorder %s16, 3
      %p237 = pnand %p235, %p236
      %p238 = pneg %p237
      // Predicated region
      $region9: #{tpu_custom_call.1} parent=5 // pred_check
        _
      $region10: #{tpu_custom_call.1} parent=5 // pred_check_branch
        %240 = sbr.rel (%p237) target = $region12
      $region11: #{tpu_custom_call.1} parent=5 // pred_region
        %s241 = ssub.s32 %s16, 1
        // Predicated region
        $region13: #{tpu_custom_call.1} parent=11 // pred_check
          %p242 = pneg %p54
        $region14: #{tpu_custom_call.1} parent=11 // pred_check_branch
          %244 = sbr.rel (%p242) target = $region16
        $region15: #{tpu_custom_call.1} parent=11 // pred_region
          %s246 = ssub.s32 128, 128
          %247 = vsyncadd [#allocation4], %s246
          %s248 = smul.addr %s25, 128
          %s249 = scalar_lea.hbm %s0, %s248
          %s251 = sshll.u32 [#allocation3], 4
          %s252 = int_to_ptr.vmem [resolvable:$true] %s251
          %254 = dma.hbm_to_vmem [thread:$0]  %s249, 128, %s252, [#allocation4]
        $region16: #{tpu_custom_call.1} parent=11 // pred_fallthru
          _
        // Predicated region
        $region17: #{tpu_custom_call.1} parent=11 // pred_check
          %p255 = pneg %p75
        $region18: #{tpu_custom_call.1} parent=11 // pred_check_branch
          %257 = sbr.rel (%p255) target = $region20
        $region19: #{tpu_custom_call.1} parent=11 // pred_region
          %s259 = ssub.s32 3072, 3072
          %260 = vsyncadd [#allocation7], %s259
          %s261 = sshll.u32 [#allocation6], 4
          %s262 = int_to_ptr.vmem [resolvable:$true] %s261
          %267 = dma.hbm_to_vmem [thread:$0]  %s1, 3072, %s262, [#allocation7], 192, 192, 12
        $region20: #{tpu_custom_call.1} parent=11 // pred_fallthru
          _
        // Predicated region
        $region21: #{tpu_custom_call.1} parent=11 // pred_check
          %p268 = pneg %p180
        $region22: #{tpu_custom_call.1} parent=11 // pred_check_branch
          %270 = sbr.rel (%p268) target = $region24
        $region23: #{tpu_custom_call.1} parent=11 // pred_region
          %s272 = ssub.s32 1024, 1024
          %273 = vsyncadd [#allocation7], %s272
          %s274 = sshll.u32 [#allocation10], 4
          %s275 = int_to_ptr.vmem [resolvable:$true] %s274
          %280 = dma.hbm_to_vmem [thread:$0]  %s5, 1024, %s275, [#allocation7], 64, 64, 4
        $region24: #{tpu_custom_call.1} parent=11 // pred_fallthru
          _
        // Predicated region
        $region25: #{tpu_custom_call.1} parent=11 // pred_check
          %p281 = pneg %p201
        $region26: #{tpu_custom_call.1} parent=11 // pred_check_branch
          %283 = sbr.rel (%p281) target = $region28
        $region27: #{tpu_custom_call.1} parent=11 // pred_region
          _
        $region28: #{tpu_custom_call.1} parent=11 // pred_fallthru
          _
      $region12: #{tpu_custom_call.1} parent=5 // pred_fallthru
        _
      %p284 = scmp.lt.s32.totalorder %s16, 2
      // Predicated region
      $region29: #{tpu_custom_call.1} parent=5 // pred_check
        %p285 = pneg %p284
      $region30: #{tpu_custom_call.1} parent=5 // pred_check_branch
        %287 = sbr.rel (%p285) target = $region32
      $region31: #{tpu_custom_call.1} parent=5 // pred_region
        // Predicated region
        $region33: #{tpu_custom_call.1} parent=31 // pred_check
          %p288 = pneg %p101
        $region34: #{tpu_custom_call.1} parent=31 // pred_check_branch
          %290 = sbr.rel (%p288) target = $region36
        $region35: #{tpu_custom_call.1} parent=31 // pred_region
          %s291 = sand.u32 %s16, 1
          %s292 = scalar_lea.sflag [#allocation4], %s291
          %s293 = sand.u32 %s91, 1
          %s294 = smul.addr %s293, 192
          %s295 = scalar_lea.vmem [#allocation8], %s294
          %s296 = ssub.s32 %s24, 1
          %p297 = scmp.gt.s32.totalorder %s296, 0
          %s298 = scalar_select %p297, %s296, 0
          %s300 = ssub.s32 3072, 3072
          %301 = vsyncadd %s292, %s300
          %s302 = smul.addr %s298, 48
          %s303 = smul.addr %s302, 64
          %s304 = scalar_lea.hbm %s2, %s303
          %s305 = sshll.u32 %s295, 4
          %s306 = int_to_ptr.vmem [resolvable:$true] %s305
          %311 = dma.hbm_to_vmem [thread:$0]  %s304, 3072, %s306, %s292, 192, 192, 12
        $region36: #{tpu_custom_call.1} parent=31 // pred_fallthru
          _
        // Predicated region
        $region37: #{tpu_custom_call.1} parent=31 // pred_check
          %p312 = pneg %p127
        $region38: #{tpu_custom_call.1} parent=31 // pred_check_branch
          %314 = sbr.rel (%p312) target = $region40
        $region39: #{tpu_custom_call.1} parent=31 // pred_region
          %s315 = sand.u32 %s16, 1
          %s316 = scalar_lea.sflag [#allocation4], %s315
          %s317 = sand.u32 %s117, 1
          %s318 = smul.addr %s317, 3
          %s319 = scalar_lea.vmem [#allocation9], %s318
          %s321 = ssub.s32 48, 48
          %322 = vsyncadd %s316, %s321
          %s323 = smul.addr %s24, 3
          %s324 = smul.addr %s323, 16
          %s325 = scalar_lea.hbm %s3, %s324
          %s327 = sshll.u32 %s319, 4
          %s328 = int_to_ptr.vmem [resolvable:$true] %s327
          %330 = dma.hbm_to_vmem [thread:$0]  %s325, 48, %s328, %s316
        $region40: #{tpu_custom_call.1} parent=31 // pred_fallthru
          _
        // Predicated region
        $region41: #{tpu_custom_call.1} parent=31 // pred_check
          %p331 = pneg %p153
        $region42: #{tpu_custom_call.1} parent=31 // pred_check_branch
          %333 = sbr.rel (%p331) target = $region44
        $region43: #{tpu_custom_call.1} parent=31 // pred_region
          %p334 = scmp.lt.s32.totalorder %s24, 1
          %s335 = scalar_select %p334, %s24, 1
          %s336 = scalar_lea.vmem %s4, %s335
        $region44: #{tpu_custom_call.1} parent=31 // pred_fallthru
          _
      $region32: #{tpu_custom_call.1} parent=5 // pred_fallthru
        _
      %p337 = scmp.le.s32.totalorder 1, %s16
      %p338 = scmp.lt.s32.totalorder %s16, 3
      %p339 = pnand %p337, %p338
      %p340 = pneg %p339
      // Predicated region
      $region45: #{tpu_custom_call.1} parent=5 // pred_check
        _
      $region46: #{tpu_custom_call.1} parent=5 // pred_check_branch
        %342 = sbr.rel (%p339) target = $region48
      $region47: #{tpu_custom_call.1} parent=5 // pred_region
        %s343 = ssub.s32 %s16, 1
        // Predicated region
        $region49: #{tpu_custom_call.1} parent=47 // pred_check
          %p344 = pneg %p54
        $region50: #{tpu_custom_call.1} parent=47 // pred_check_branch
          %346 = sbr.rel (%p344) target = $region52
        $region51: #{tpu_custom_call.1} parent=47 // pred_region
          %347 = dma.done [#allocation4], 128
        $region52: #{tpu_custom_call.1} parent=47 // pred_fallthru
          _
        // Predicated region
        $region53: #{tpu_custom_call.1} parent=47 // pred_check
          %p348 = pneg %p75
        $region54: #{tpu_custom_call.1} parent=47 // pred_check_branch
          %350 = sbr.rel (%p348) target = $region56
        $region55: #{tpu_custom_call.1} parent=47 // pred_region
          %351 = dma.done [#allocation7], 3072
        $region56: #{tpu_custom_call.1} parent=47 // pred_fallthru
          _
        %s352 = sand.u32 %s21, 1
        %s353 = scalar_lea.sflag [#allocation4], %s352
        %s354 = sand.u32 %s94, 1
        %s355 = smul.addr %s354, 192
        %s356 = scalar_lea.vmem [#allocation8], %s355
        // Predicated region
        $region57: #{tpu_custom_call.1} parent=47 // pred_check
          %p357 = pneg %p107
        $region58: #{tpu_custom_call.1} parent=47 // pred_check_branch
          %359 = sbr.rel (%p357) target = $region60
        $region59: #{tpu_custom_call.1} parent=47 // pred_region
          %360 = dma.done %s353, 3072
        $region60: #{tpu_custom_call.1} parent=47 // pred_fallthru
          _
        %s361 = sand.u32 %s21, 1
        %s362 = scalar_lea.sflag [#allocation4], %s361
        %s363 = sand.u32 %s120, 1
        %s364 = smul.addr %s363, 3
        %s365 = scalar_lea.vmem [#allocation9], %s364
        // Predicated region
        $region61: #{tpu_custom_call.1} parent=47 // pred_check
          %p366 = pneg %p133
        $region62: #{tpu_custom_call.1} parent=47 // pred_check_branch
          %368 = sbr.rel (%p366) target = $region64
        $region63: #{tpu_custom_call.1} parent=47 // pred_region
          %369 = dma.done %s362, 48
        $region64: #{tpu_custom_call.1} parent=47 // pred_fallthru
          _
        // Predicated region
        $region65: #{tpu_custom_call.1} parent=47 // pred_check
          %p370 = pneg %p180
        $region66: #{tpu_custom_call.1} parent=47 // pred_check_branch
          %372 = sbr.rel (%p370) target = $region68
        $region67: #{tpu_custom_call.1} parent=47 // pred_region
          %373 = dma.done [#allocation7], 1024
        $region68: #{tpu_custom_call.1} parent=47 // pred_fallthru
          _
        %p374 = pneg %p54
        %p375 = pneg %p51
        %p376 = pneg %p75
        %p377 = pneg %p72
        %s378 = sand.u32 %s21, 1
        %s379 = scalar_lea.sflag [#allocation4], %s378
        %s380 = sand.u32 %s94, 1
        %s381 = smul.addr %s380, 192
        %s382 = scalar_lea.vmem [#allocation8], %s381
        %p383 = pneg %p107
        %p384 = pneg %p104
        %s385 = sand.u32 %s21, 1
        %s386 = scalar_lea.sflag [#allocation4], %s385
        %s387 = sand.u32 %s120, 1
        %s388 = smul.addr %s387, 3
        %s389 = scalar_lea.vmem [#allocation9], %s388
        %p390 = pneg %p133
        %p391 = pneg %p130
        %p392 = scmp.lt.s32.totalorder %s26, 1
        %s393 = scalar_select %p392, %s26, 1
        %s394 = scalar_lea.vmem %s4, %s393
        %p395 = pneg %p159
        %p396 = pneg %p156
        %p397 = pneg %p180
        %p398 = pneg %p177
        %p399 = pneg %p201
        %p400 = pneg %p198
        %p401 = pneg %p227
        %p402 = pneg %p224
        %s403 = ssub.s32 %s26, 1
        %p404 = scmp.gt.s32.totalorder %s403, 0
        %s405 = scalar_select %p404, %s403, 0
        %p406 = scmp.lt.s32.totalorder %s26, 1
        %s407 = scalar_select %p406, %s26, 1
        %s408 = scalar_lea.vmem %s4, %s407
        %p410 = scmp.eq.s32.totalorder %s26, 0
        // Predicated region
        $region69: #{tpu_custom_call.1} parent=47 // pred_check
          %p411 = pneg %p410
        $region70: #{tpu_custom_call.1} parent=47 // pred_check_branch
          %413 = sbr.rel (%p411) target = $region72
        $region71: #{tpu_custom_call.1} parent=47 // pred_region
          %v414 = vld [vmem:[#allocation3] sm:$0xff]
          %v415 = vld [vmem:[#allocation6] sm:$0xff]
          %v416 = vld [vmem:[#allocation6 + $0x8] sm:$0xf]
          %v417 = vld [vmem:[#allocation6 + $0xc] sm:$0xff]
          %v418 = vld [vmem:[#allocation6 + $0x14] sm:$0xf]
          %v419 = vld [vmem:[#allocation6 + $0x18] sm:$0xff]
          %v420 = vld [vmem:[#allocation6 + $0x20] sm:$0xf]
          %v421 = vld [vmem:[#allocation6 + $0x24] sm:$0xff]
          %v422 = vld [vmem:[#allocation6 + $0x2c] sm:$0xf]
          %v423 = vld [vmem:[#allocation6 + $0x30] sm:$0xff]
          %v424 = vld [vmem:[#allocation6 + $0x38] sm:$0xf]
          %v425 = vld [vmem:[#allocation6 + $0x3c] sm:$0xff]
          %v426 = vld [vmem:[#allocation6 + $0x44] sm:$0xf]
          %v427 = vld [vmem:[#allocation6 + $0x48] sm:$0xff]
          %v428 = vld [vmem:[#allocation6 + $0x50] sm:$0xf]
          %v429 = vld [vmem:[#allocation6 + $0x54] sm:$0xff]
          %v430 = vld [vmem:[#allocation6 + $0x5c] sm:$0xf]
          %v431 = vld [vmem:[#allocation6 + $0x60] sm:$0xff]
          %v432 = vld [vmem:[#allocation6 + $0x68] sm:$0xf]
          %v433 = vld [vmem:[#allocation6 + $0x6c] sm:$0xff]
          %v434 = vld [vmem:[#allocation6 + $0x74] sm:$0xf]
          %v435 = vld [vmem:[#allocation6 + $0x78] sm:$0xff]
          %v436 = vld [vmem:[#allocation6 + $0x80] sm:$0xf]
          %v437 = vld [vmem:[#allocation6 + $0x84] sm:$0xff]
          %v438 = vld [vmem:[#allocation6 + $0x8c] sm:$0xf]
          %v439 = vld [vmem:[#allocation6 + $0x90] sm:$0xff]
          %v440 = vld [vmem:[#allocation6 + $0x98] sm:$0xf]
          %v441 = vld [vmem:[#allocation6 + $0x9c] sm:$0xff]
          %v442 = vld [vmem:[#allocation6 + $0xa4] sm:$0xf]
          %v443 = vld [vmem:[#allocation6 + $0xa8] sm:$0xff]
          %v444 = vld [vmem:[#allocation6 + $0xb0] sm:$0xf]
          %v445 = vld [vmem:[#allocation6 + $0xb4] sm:$0xff]
          %v446 = vld [vmem:[#allocation6 + $0xbc] sm:$0xf]
          %v447 = vpack.c.bf16 %v414, %v414
          %v448 = vld [vmem:[%s365] sm:$0x7]
          %v450 = vlaneseq
          %v451 = vshrl.u32 %v450, 7
          %v452 = vsub.s32 0, %v451
          %v453 = vrot.slane %v448, %v452
          %v454 = vlaneseq
          %v455 = vshrl.u32 %v454, 7
          %v456 = vsub.s32 1, %v455
          %v457 = vrot.slane %v448, %v456
          %v458 = vlaneseq
          %v459 = vshrl.u32 %v458, 7
          %v460 = vsub.s32 2, %v459
          %v461 = vrot.slane %v448, %v460
          %v497 = vunpack.c.l.b16 %v415
          %v498 = vunpack.c.h.b16 %v415
          %v499 = vunpack.c.l.b16 %v416
          %v500 = vunpack.c.l.b16 %v417
          %v501 = vunpack.c.h.b16 %v417
          %v502 = vunpack.c.l.b16 %v418
          %v503 = vunpack.c.l.b16 %v419
          %v504 = vunpack.c.h.b16 %v419
          %v505 = vunpack.c.l.b16 %v420
          %v506 = vunpack.c.l.b16 %v421
          %v507 = vunpack.c.h.b16 %v421
          %v508 = vunpack.c.l.b16 %v422
          %v509 = vunpack.c.l.b16 %v423
          %v510 = vunpack.c.h.b16 %v423
          %v511 = vunpack.c.l.b16 %v424
          %v512 = vunpack.c.l.b16 %v425
          %v513 = vunpack.c.h.b16 %v425
          %v514 = vunpack.c.l.b16 %v426
          %v515 = vunpack.c.l.b16 %v427
          %v516 = vunpack.c.h.b16 %v427
          %v517 = vunpack.c.l.b16 %v428
          %v518 = vunpack.c.l.b16 %v429
          %v519 = vunpack.c.h.b16 %v429
          %v520 = vunpack.c.l.b16 %v430
          %v521 = vunpack.c.l.b16 %v431
          %v522 = vunpack.c.h.b16 %v431
          %v523 = vunpack.c.l.b16 %v432
          %v524 = vunpack.c.l.b16 %v433
          %v525 = vunpack.c.h.b16 %v433
          %v526 = vunpack.c.l.b16 %v434
          %v527 = vunpack.c.l.b16 %v435
          %v528 = vunpack.c.h.b16 %v435
          %v529 = vunpack.c.l.b16 %v436
          %v530 = vunpack.c.l.b16 %v437
          %v531 = vunpack.c.h.b16 %v437
          %v532 = vunpack.c.l.b16 %v438
          %v533 = vunpack.c.l.b16 %v439
          %v534 = vunpack.c.h.b16 %v439
          %v535 = vunpack.c.l.b16 %v440
          %v536 = vunpack.c.l.b16 %v441
          %v537 = vunpack.c.h.b16 %v441
          %v538 = vunpack.c.l.b16 %v442
          %v539 = vunpack.c.l.b16 %v443
          %v540 = vunpack.c.h.b16 %v443
          %v541 = vunpack.c.l.b16 %v444
          %v542 = vunpack.c.l.b16 %v445
          %v543 = vunpack.c.h.b16 %v445
          %v544 = vunpack.c.l.b16 %v446
          %v545 = vpack.c.b16 %v500, %v497
          %v546 = vpack.c.b16 %v501, %v498
          %v547 = vpack.c.b16 %v502, %v499
          %v548 = vpack.c.b16 %v506, %v503
          %v549 = vpack.c.b16 %v507, %v504
          %v550 = vpack.c.b16 %v508, %v505
          %v551 = vpack.c.b16 %v512, %v509
          %v552 = vpack.c.b16 %v513, %v510
          %v553 = vpack.c.b16 %v514, %v511
          %v554 = vpack.c.b16 %v518, %v515
          %v555 = vpack.c.b16 %v519, %v516
          %v556 = vpack.c.b16 %v520, %v517
          %v557 = vpack.c.b16 %v524, %v521
          %v558 = vpack.c.b16 %v525, %v522
          %v559 = vpack.c.b16 %v526, %v523
          %v560 = vpack.c.b16 %v530, %v527
          %v561 = vpack.c.b16 %v531, %v528
          %v562 = vpack.c.b16 %v532, %v529
          %v563 = vpack.c.b16 %v536, %v533
          %v564 = vpack.c.b16 %v537, %v534
          %v565 = vpack.c.b16 %v538, %v535
          %v566 = vpack.c.b16 %v542, %v539
          %v567 = vpack.c.b16 %v543, %v540
          %v568 = vpack.c.b16 %v544, %v541
          %593 = vmatprep.subr.bf16.mxu0 %v567
          %594 = vmatpush1.bf16.msra.mxu0 %v566
          %595 = vmatprep.subr.bf16.mxu0 %v564
          %596 = vmatpush1.bf16.msra.mxu0 %v563
          %597 = vmatprep.subr.bf16.mxu0 %v561
          %598 = vmatpush1.bf16.msra.mxu0 %v560
          %599 = vmatprep.subr.bf16.mxu0 %v558
          %600 = vmatpush1.bf16.msra.mxu0 %v557
          %601 = vmatprep.subr.bf16.mxu0 %v555
          %602 = vmatpush1.bf16.msra.mxu0 %v554
          %603 = vmatprep.subr.bf16.mxu0 %v552
          %604 = vmatpush1.bf16.msra.mxu0 %v551
          %605 = vmatprep.subr.bf16.mxu0 %v549
          %606 = vmatpush1.bf16.msra.mxu0 %v548
          %607 = vmatprep.subr.bf16.mxu0 %v546
          %608 = vmatpush1.bf16.msra.mxu0 %v545
          %609 = vmatprep.subr.bf16.mxu0 0
          %610 = vmatpush2.bf16.msra.mxu0 0
          %611 = vmatprep.subr.bf16.mxu0 0
          %612 = vmatpush2.bf16.msra.mxu0 0
          %613 = vmatprep.subr.bf16.mxu0 0
          %614 = vmatpush2.bf16.msra.mxu0 0
          %615 = vmatprep.subr.bf16.mxu0 0
          %616 = vmatpush2.bf16.msra.mxu0 0
          %617 = vmatprep.subr.bf16.mxu0 0
          %618 = vmatpush2.bf16.msra.mxu0 0
          %619 = vmatprep.subr.bf16.mxu0 0
          %620 = vmatpush2.bf16.msra.mxu0 0
          %621 = vmatprep.subr.bf16.mxu0 0
          %622 = vmatpush2.bf16.msra.mxu0 0
          %623 = vmatprep.subr.bf16.mxu0 0
          %624 = vmatpush2.bf16.msra.mxu0 0
          %625 = vmatprep.mubr.bf16.mxu0 0
          %626 = vmatmul.mubr.bf16.gmra.mxu0 %v447
          %v627 = vpop.f32.mrf.mxu0
          %v628 = vadd.f32 %v453, %v627
          %v629 = vpop.f32.mrf.mxu0
          %v630 = vadd.f32 %v457, %v629
          %v631 = vpop.f32.mrf.mxu0
          %v632 = vpop.f32.mrf.mxu0
          %633 = vdwg.mxu0
          %634 = vmatprep.subr.bf16.mxu0 0
          %635 = vmatpush1.bf16.msra.mxu0 %v568
          %636 = vmatprep.subr.bf16.mxu0 0
          %637 = vmatpush1.bf16.msra.mxu0 %v565
          %638 = vmatprep.subr.bf16.mxu0 0
          %639 = vmatpush1.bf16.msra.mxu0 %v562
          %640 = vmatprep.subr.bf16.mxu0 0
          %641 = vmatpush1.bf16.msra.mxu0 %v559
          %642 = vmatprep.subr.bf16.mxu0 0
          %643 = vmatpush1.bf16.msra.mxu0 %v556
          %644 = vmatprep.subr.bf16.mxu0 0
          %645 = vmatpush1.bf16.msra.mxu0 %v553
          %646 = vmatprep.subr.bf16.mxu0 0
          %647 = vmatpush1.bf16.msra.mxu0 %v550
          %648 = vmatprep.subr.bf16.mxu0 0
          %649 = vmatpush1.bf16.msra.mxu0 %v547
          %650 = vmatprep.subr.bf16.mxu0 0
          %651 = vmatpush2.bf16.msra.mxu0 0
          %652 = vmatprep.subr.bf16.mxu0 0
          %653 = vmatpush2.bf16.msra.mxu0 0
          %654 = vmatprep.subr.bf16.mxu0 0
          %655 = vmatpush2.bf16.msra.mxu0 0
          %656 = vmatprep.subr.bf16.mxu0 0
          %657 = vmatpush2.bf16.msra.mxu0 0
          %658 = vmatprep.subr.bf16.mxu0 0
          %659 = vmatpush2.bf16.msra.mxu0 0
          %660 = vmatprep.subr.bf16.mxu0 0
          %661 = vmatpush2.bf16.msra.mxu0 0
          %662 = vmatprep.subr.bf16.mxu0 0
          %663 = vmatpush2.bf16.msra.mxu0 0
          %664 = vmatprep.subr.bf16.mxu0 0
          %665 = vmatpush2.bf16.msra.mxu0 0
          %666 = vmatprep.mubr.bf16.mxu0 0
          %667 = vmatmul.mubr.bf16.gmra.mxu0 %v447
          %v668 = vpop.f32.mrf.mxu0
          %v669 = vadd.f32 %v461, %v668
          %v670 = vpop.f32.mrf.mxu0
          %v671 = vpop.f32.mrf.mxu0
          %v672 = vpop.f32.mrf.mxu0
          %673 = vdwg.mxu0
          %v674 = vxor.u32 %v628, 2147483648
          %v675 = vmul.f32 %v674, 1.442695
          %v676 = vpow.pop %v675
          %v677 = vadd.f32 %v676, 1.0
          %v678 = vrcp.pop %v677
          %v679 = vmul.f32 1.0, %v678
          %v680 = vxor.u32 %v630, 2147483648
          %v681 = vmul.f32 %v680, 1.442695
          %v682 = vpow.pop %v681
          %v683 = vadd.f32 %v682, 1.0
          %v684 = vrcp.pop %v683
          %v685 = vmul.f32 1.0, %v684
          %v686 = vld [vmem:[%s408] sm:$0x1]
          %v688 = vlaneseq
          %v689 = vshrl.u32 %v688, 7
          %v690 = vsub.s32 0, %v689
          %v691 = vrot.slane %v686, %v690
          %v693 = vmul.f32 %v679, %v691
          %v694 = vadd.f32 %v669, %v693
          %v695 = vtanh.pop %v694
          %v696 = vsub.f32 1.0, %v685
          %v697 = vmul.f32 %v696, %v695
          %698 = vst [vmem:[#allocation2] sm:$0xff] %v697
        $region72: #{tpu_custom_call.1} parent=47 // pred_fallthru
          _
        %p699 = scmp.gt.s32.totalorder %s26, 0
        // Predicated region
        $region73: #{tpu_custom_call.1} parent=47 // pred_check
          %p700 = pneg %p699
        $region74: #{tpu_custom_call.1} parent=47 // pred_check_branch
          %702 = sbr.rel (%p700) target = $region76
        $region75: #{tpu_custom_call.1} parent=47 // pred_region
          %v703 = vld [vmem:[#allocation2] sm:$0xff]
          %v704 = vld [vmem:[%s356] sm:$0xff]
          %v705 = vld [vmem:[%s356 + $0x8] sm:$0xf]
          %v706 = vld [vmem:[%s356 + $0xc] sm:$0xff]
          %v707 = vld [vmem:[%s356 + $0x14] sm:$0xf]
          %v708 = vld [vmem:[%s356 + $0x18] sm:$0xff]
          %v709 = vld [vmem:[%s356 + $0x20] sm:$0xf]
          %v710 = vld [vmem:[%s356 + $0x24] sm:$0xff]
          %v711 = vld [vmem:[%s356 + $0x2c] sm:$0xf]
          %v712 = vld [vmem:[%s356 + $0x30] sm:$0xff]
          %v713 = vld [vmem:[%s356 + $0x38] sm:$0xf]
          %v714 = vld [vmem:[%s356 + $0x3c] sm:$0xff]
          %v715 = vld [vmem:[%s356 + $0x44] sm:$0xf]
          %v716 = vld [vmem:[%s356 + $0x48] sm:$0xff]
          %v717 = vld [vmem:[%s356 + $0x50] sm:$0xf]
          %v718 = vld [vmem:[%s356 + $0x54] sm:$0xff]
          %v719 = vld [vmem:[%s356 + $0x5c] sm:$0xf]
          %v720 = vld [vmem:[%s356 + $0x60] sm:$0xff]
          %v721 = vld [vmem:[%s356 + $0x68] sm:$0xf]
          %v722 = vld [vmem:[%s356 + $0x6c] sm:$0xff]
          %v723 = vld [vmem:[%s356 + $0x74] sm:$0xf]
          %v724 = vld [vmem:[%s356 + $0x78] sm:$0xff]
          %v725 = vld [vmem:[%s356 + $0x80] sm:$0xf]
          %v726 = vld [vmem:[%s356 + $0x84] sm:$0xff]
          %v727 = vld [vmem:[%s356 + $0x8c] sm:$0xf]
          %v728 = vld [vmem:[%s356 + $0x90] sm:$0xff]
          %v729 = vld [vmem:[%s356 + $0x98] sm:$0xf]
          %v730 = vld [vmem:[%s356 + $0x9c] sm:$0xff]
          %v731 = vld [vmem:[%s356 + $0xa4] sm:$0xf]
          %v732 = vld [vmem:[%s356 + $0xa8] sm:$0xff]
          %v733 = vld [vmem:[%s356 + $0xb0] sm:$0xf]
          %v734 = vld [vmem:[%s356 + $0xb4] sm:$0xff]
          %v735 = vld [vmem:[%s356 + $0xbc] sm:$0xf]
          %v736 = vpack.c.bf16 %v703, %v703
          %v737 = vld [vmem:[%s365] sm:$0x7]
          %v739 = vlaneseq
          %v740 = vshrl.u32 %v739, 7
          %v741 = vsub.s32 0, %v740
          %v742 = vrot.slane %v737, %v741
          %v743 = vlaneseq
          %v744 = vshrl.u32 %v743, 7
          %v745 = vsub.s32 1, %v744
          %v746 = vrot.slane %v737, %v745
          %v747 = vlaneseq
          %v748 = vshrl.u32 %v747, 7
          %v749 = vsub.s32 2, %v748
          %v750 = vrot.slane %v737, %v749
          %v786 = vunpack.c.l.b16 %v704
          %v787 = vunpack.c.h.b16 %v704
          %v788 = vunpack.c.l.b16 %v705
          %v789 = vunpack.c.l.b16 %v706
          %v790 = vunpack.c.h.b16 %v706
          %v791 = vunpack.c.l.b16 %v707
          %v792 = vunpack.c.l.b16 %v708
          %v793 = vunpack.c.h.b16 %v708
          %v794 = vunpack.c.l.b16 %v709
          %v795 = vunpack.c.l.b16 %v710
          %v796 = vunpack.c.h.b16 %v710
          %v797 = vunpack.c.l.b16 %v711
          %v798 = vunpack.c.l.b16 %v712
          %v799 = vunpack.c.h.b16 %v712
          %v800 = vunpack.c.l.b16 %v713
          %v801 = vunpack.c.l.b16 %v714
          %v802 = vunpack.c.h.b16 %v714
          %v803 = vunpack.c.l.b16 %v715
          %v804 = vunpack.c.l.b16 %v716
          %v805 = vunpack.c.h.b16 %v716
          %v806 = vunpack.c.l.b16 %v717
          %v807 = vunpack.c.l.b16 %v718
          %v808 = vunpack.c.h.b16 %v718
          %v809 = vunpack.c.l.b16 %v719
          %v810 = vunpack.c.l.b16 %v720
          %v811 = vunpack.c.h.b16 %v720
          %v812 = vunpack.c.l.b16 %v721
          %v813 = vunpack.c.l.b16 %v722
          %v814 = vunpack.c.h.b16 %v722
          %v815 = vunpack.c.l.b16 %v723
          %v816 = vunpack.c.l.b16 %v724
          %v817 = vunpack.c.h.b16 %v724
          %v818 = vunpack.c.l.b16 %v725
          %v819 = vunpack.c.l.b16 %v726
          %v820 = vunpack.c.h.b16 %v726
          %v821 = vunpack.c.l.b16 %v727
          %v822 = vunpack.c.l.b16 %v728
          %v823 = vunpack.c.h.b16 %v728
          %v824 = vunpack.c.l.b16 %v729
          %v825 = vunpack.c.l.b16 %v730
          %v826 = vunpack.c.h.b16 %v730
          %v827 = vunpack.c.l.b16 %v731
          %v828 = vunpack.c.l.b16 %v732
          %v829 = vunpack.c.h.b16 %v732
          %v830 = vunpack.c.l.b16 %v733
          %v831 = vunpack.c.l.b16 %v734
          %v832 = vunpack.c.h.b16 %v734
          %v833 = vunpack.c.l.b16 %v735
          %v834 = vpack.c.b16 %v789, %v786
          %v835 = vpack.c.b16 %v790, %v787
          %v836 = vpack.c.b16 %v791, %v788
          %v837 = vpack.c.b16 %v795, %v792
          %v838 = vpack.c.b16 %v796, %v793
          %v839 = vpack.c.b16 %v797, %v794
          %v840 = vpack.c.b16 %v801, %v798
          %v841 = vpack.c.b16 %v802, %v799
          %v842 = vpack.c.b16 %v803, %v800
          %v843 = vpack.c.b16 %v807, %v804
          %v844 = vpack.c.b16 %v808, %v805
          %v845 = vpack.c.b16 %v809, %v806
          %v846 = vpack.c.b16 %v813, %v810
          %v847 = vpack.c.b16 %v814, %v811
          %v848 = vpack.c.b16 %v815, %v812
          %v849 = vpack.c.b16 %v819, %v816
          %v850 = vpack.c.b16 %v820, %v817
          %v851 = vpack.c.b16 %v821, %v818
          %v852 = vpack.c.b16 %v825, %v822
          %v853 = vpack.c.b16 %v826, %v823
          %v854 = vpack.c.b16 %v827, %v824
          %v855 = vpack.c.b16 %v831, %v828
          %v856 = vpack.c.b16 %v832, %v829
          %v857 = vpack.c.b16 %v833, %v830
          %882 = vmatprep.subr.bf16.mxu0 %v856
          %883 = vmatpush1.bf16.msra.mxu0 %v855
          %884 = vmatprep.subr.bf16.mxu0 %v853
          %885 = vmatpush1.bf16.msra.mxu0 %v852
          %886 = vmatprep.subr.bf16.mxu0 %v850
          %887 = vmatpush1.bf16.msra.mxu0 %v849
          %888 = vmatprep.subr.bf16.mxu0 %v847
          %889 = vmatpush1.bf16.msra.mxu0 %v846
          %890 = vmatprep.subr.bf16.mxu0 %v844
          %891 = vmatpush1.bf16.msra.mxu0 %v843
          %892 = vmatprep.subr.bf16.mxu0 %v841
          %893 = vmatpush1.bf16.msra.mxu0 %v840
          %894 = vmatprep.subr.bf16.mxu0 %v838
          %895 = vmatpush1.bf16.msra.mxu0 %v837
          %896 = vmatprep.subr.bf16.mxu0 %v835
          %897 = vmatpush1.bf16.msra.mxu0 %v834
          %898 = vmatprep.subr.bf16.mxu0 0
          %899 = vmatpush2.bf16.msra.mxu0 0
          %900 = vmatprep.subr.bf16.mxu0 0
          %901 = vmatpush2.bf16.msra.mxu0 0
          %902 = vmatprep.subr.bf16.mxu0 0
          %903 = vmatpush2.bf16.msra.mxu0 0
          %904 = vmatprep.subr.bf16.mxu0 0
          %905 = vmatpush2.bf16.msra.mxu0 0
          %906 = vmatprep.subr.bf16.mxu0 0
          %907 = vmatpush2.bf16.msra.mxu0 0
          %908 = vmatprep.subr.bf16.mxu0 0
          %909 = vmatpush2.bf16.msra.mxu0 0
          %910 = vmatprep.subr.bf16.mxu0 0
          %911 = vmatpush2.bf16.msra.mxu0 0
          %912 = vmatprep.subr.bf16.mxu0 0
          %913 = vmatpush2.bf16.msra.mxu0 0
          %914 = vmatprep.mubr.bf16.mxu0 0
          %915 = vmatmul.mubr.bf16.gmra.mxu0 %v736
          %v916 = vpop.f32.mrf.mxu0
          %v917 = vadd.f32 %v742, %v916
          %v918 = vpop.f32.mrf.mxu0
          %v919 = vadd.f32 %v746, %v918
          %v920 = vpop.f32.mrf.mxu0
          %v921 = vpop.f32.mrf.mxu0
          %922 = vdwg.mxu0
          %923 = vmatprep.subr.bf16.mxu0 0
          %924 = vmatpush1.bf16.msra.mxu0 %v857
          %925 = vmatprep.subr.bf16.mxu0 0
          %926 = vmatpush1.bf16.msra.mxu0 %v854
          %927 = vmatprep.subr.bf16.mxu0 0
          %928 = vmatpush1.bf16.msra.mxu0 %v851
          %929 = vmatprep.subr.bf16.mxu0 0
          %930 = vmatpush1.bf16.msra.mxu0 %v848
          %931 = vmatprep.subr.bf16.mxu0 0
          %932 = vmatpush1.bf16.msra.mxu0 %v845
          %933 = vmatprep.subr.bf16.mxu0 0
          %934 = vmatpush1.bf16.msra.mxu0 %v842
          %935 = vmatprep.subr.bf16.mxu0 0
          %936 = vmatpush1.bf16.msra.mxu0 %v839
          %937 = vmatprep.subr.bf16.mxu0 0
          %938 = vmatpush1.bf16.msra.mxu0 %v836
          %939 = vmatprep.subr.bf16.mxu0 0
          %940 = vmatpush2.bf16.msra.mxu0 0
          %941 = vmatprep.subr.bf16.mxu0 0
          %942 = vmatpush2.bf16.msra.mxu0 0
          %943 = vmatprep.subr.bf16.mxu0 0
          %944 = vmatpush2.bf16.msra.mxu0 0
          %945 = vmatprep.subr.bf16.mxu0 0
          %946 = vmatpush2.bf16.msra.mxu0 0
          %947 = vmatprep.subr.bf16.mxu0 0
          %948 = vmatpush2.bf16.msra.mxu0 0
          %949 = vmatprep.subr.bf16.mxu0 0
          %950 = vmatpush2.bf16.msra.mxu0 0
          %951 = vmatprep.subr.bf16.mxu0 0
          %952 = vmatpush2.bf16.msra.mxu0 0
          %953 = vmatprep.subr.bf16.mxu0 0
          %954 = vmatpush2.bf16.msra.mxu0 0
          %955 = vmatprep.mubr.bf16.mxu0 0
          %956 = vmatmul.mubr.bf16.gmra.mxu0 %v736
          %v957 = vpop.f32.mrf.mxu0
          %v958 = vadd.f32 %v750, %v957
          %v959 = vpop.f32.mrf.mxu0
          %v960 = vpop.f32.mrf.mxu0
          %v961 = vpop.f32.mrf.mxu0
          %962 = vdwg.mxu0
          %v963 = vxor.u32 %v917, 2147483648
          %v964 = vmul.f32 %v963, 1.442695
          %v965 = vpow.pop %v964
          %v966 = vadd.f32 %v965, 1.0
          %v967 = vrcp.pop %v966
          %v968 = vmul.f32 1.0, %v967
          %v969 = vxor.u32 %v919, 2147483648
          %v970 = vmul.f32 %v969, 1.442695
          %v971 = vpow.pop %v970
          %v972 = vadd.f32 %v971, 1.0
          %v973 = vrcp.pop %v972
          %v974 = vmul.f32 1.0, %v973
          %v975 = vld [vmem:[%s408] sm:$0x1]
          %v977 = vlaneseq
          %v978 = vshrl.u32 %v977, 7
          %v979 = vsub.s32 0, %v978
          %v980 = vrot.slane %v975, %v979
          %v982 = vmul.f32 %v968, %v980
          %v983 = vadd.f32 %v958, %v982
          %v984 = vtanh.pop %v983
          %v985 = vsub.f32 1.0, %v974
          %v986 = vmul.f32 %v985, %v984
          %987 = vst [vmem:[#allocation2] sm:$0xff] %v986
        $region76: #{tpu_custom_call.1} parent=47 // pred_fallthru
          _
        %p988 = scmp.eq.s32.totalorder %s26, 1
        // Predicated region
        $region77: #{tpu_custom_call.1} parent=47 // pred_check
          %p989 = pneg %p988
        $region78: #{tpu_custom_call.1} parent=47 // pred_check_branch
          %991 = sbr.rel (%p989) target = $region80
        $region79: #{tpu_custom_call.1} parent=47 // pred_region
          %v992 = vld [vmem:[#allocation2] sm:$0xff]
          %v993 = vpack.c.bf16 %v992, %v992
          %v994 = vld [vmem:[#allocation10] sm:$0xf]
          %v995 = vld [vmem:[#allocation10 + $0x4] sm:$0xf]
          %v996 = vld [vmem:[#allocation10 + $0x8] sm:$0xf]
          %v997 = vld [vmem:[#allocation10 + $0xc] sm:$0xf]
          %v998 = vld [vmem:[#allocation10 + $0x10] sm:$0xf]
          %v999 = vld [vmem:[#allocation10 + $0x14] sm:$0xf]
          %v1000 = vld [vmem:[#allocation10 + $0x18] sm:$0xf]
          %v1001 = vld [vmem:[#allocation10 + $0x1c] sm:$0xf]
          %v1002 = vld [vmem:[#allocation10 + $0x20] sm:$0xf]
          %v1003 = vld [vmem:[#allocation10 + $0x24] sm:$0xf]
          %v1004 = vld [vmem:[#allocation10 + $0x28] sm:$0xf]
          %v1005 = vld [vmem:[#allocation10 + $0x2c] sm:$0xf]
          %v1006 = vld [vmem:[#allocation10 + $0x30] sm:$0xf]
          %v1007 = vld [vmem:[#allocation10 + $0x34] sm:$0xf]
          %v1008 = vld [vmem:[#allocation10 + $0x38] sm:$0xf]
          %v1009 = vld [vmem:[#allocation10 + $0x3c] sm:$0xf]
          %v1010 = vld [vmem:[%s6] sm:$0x1]
          %v1012 = vlaneseq
          %v1013 = vshrl.u32 %v1012, 7
          %v1014 = vsub.s32 0, %v1013
          %v1015 = vrot.slane %v1010, %v1014
          %v1033 = vunpack.c.l.b16 %v994
          %v1034 = vunpack.c.l.b16 %v995
          %v1035 = vunpack.c.l.b16 %v996
          %v1036 = vunpack.c.l.b16 %v997
          %v1037 = vunpack.c.l.b16 %v998
          %v1038 = vunpack.c.l.b16 %v999
          %v1039 = vunpack.c.l.b16 %v1000
          %v1040 = vunpack.c.l.b16 %v1001
          %v1041 = vunpack.c.l.b16 %v1002
          %v1042 = vunpack.c.l.b16 %v1003
          %v1043 = vunpack.c.l.b16 %v1004
          %v1044 = vunpack.c.l.b16 %v1005
          %v1045 = vunpack.c.l.b16 %v1006
          %v1046 = vunpack.c.l.b16 %v1007
          %v1047 = vunpack.c.l.b16 %v1008
          %v1048 = vunpack.c.l.b16 %v1009
          %v1049 = vpack.c.b16 %v1034, %v1033
          %v1050 = vpack.c.b16 %v1036, %v1035
          %v1051 = vpack.c.b16 %v1038, %v1037
          %v1052 = vpack.c.b16 %v1040, %v1039
          %v1053 = vpack.c.b16 %v1042, %v1041
          %v1054 = vpack.c.b16 %v1044, %v1043
          %v1055 = vpack.c.b16 %v1046, %v1045
          %v1056 = vpack.c.b16 %v1048, %v1047
          %1065 = vmatprep.subr.bf16.mxu0 0
          %1066 = vmatpush1.bf16.msra.mxu0 %v1056
          %1067 = vmatprep.subr.bf16.mxu0 0
          %1068 = vmatpush1.bf16.msra.mxu0 %v1055
          %1069 = vmatprep.subr.bf16.mxu0 0
          %1070 = vmatpush1.bf16.msra.mxu0 %v1054
          %1071 = vmatprep.subr.bf16.mxu0 0
          %1072 = vmatpush1.bf16.msra.mxu0 %v1053
          %1073 = vmatprep.subr.bf16.mxu0 0
          %1074 = vmatpush1.bf16.msra.mxu0 %v1052
          %1075 = vmatprep.subr.bf16.mxu0 0
          %1076 = vmatpush1.bf16.msra.mxu0 %v1051
          %1077 = vmatprep.subr.bf16.mxu0 0
          %1078 = vmatpush1.bf16.msra.mxu0 %v1050
          %1079 = vmatprep.subr.bf16.mxu0 0
          %1080 = vmatpush1.bf16.msra.mxu0 %v1049
          %1081 = vmatprep.subr.bf16.mxu0 0
          %1082 = vmatpush2.bf16.msra.mxu0 0
          %1083 = vmatprep.subr.bf16.mxu0 0
          %1084 = vmatpush2.bf16.msra.mxu0 0
          %1085 = vmatprep.subr.bf16.mxu0 0
          %1086 = vmatpush2.bf16.msra.mxu0 0
          %1087 = vmatprep.subr.bf16.mxu0 0
          %1088 = vmatpush2.bf16.msra.mxu0 0
          %1089 = vmatprep.subr.bf16.mxu0 0
          %1090 = vmatpush2.bf16.msra.mxu0 0
          %1091 = vmatprep.subr.bf16.mxu0 0
          %1092 = vmatpush2.bf16.msra.mxu0 0
          %1093 = vmatprep.subr.bf16.mxu0 0
          %1094 = vmatpush2.bf16.msra.mxu0 0
          %1095 = vmatprep.subr.bf16.mxu0 0
          %1096 = vmatpush2.bf16.msra.mxu0 0
          %1097 = vmatprep.mubr.bf16.mxu0 0
          %1098 = vmatmul.mubr.bf16.gmra.mxu0 %v993
          %v1099 = vpop.f32.mrf.mxu0
          %v1100 = vadd.f32 %v1015, %v1099
          %v1101 = vpop.f32.mrf.mxu0
          %v1102 = vpop.f32.mrf.mxu0
          %v1103 = vpop.f32.mrf.mxu0
          %1104 = vdwg.mxu0
          %1105 = vst [vmem:[#allocation11] sm:$0xff] %v1100
        $region80: #{tpu_custom_call.1} parent=47 // pred_fallthru
          _
        // Predicated region
        $region81: #{tpu_custom_call.1} parent=47 // pred_check
          %p1106 = pneg %p224
        $region82: #{tpu_custom_call.1} parent=47 // pred_check_branch
          %1108 = sbr.rel (%p1106) target = $region84
        $region83: #{tpu_custom_call.1} parent=47 // pred_region
          %s1110 = ssub.s32 128, 128
          %1111 = vsyncadd [#allocation5], %s1110
          %s1112 = smul.addr %s25, 128
          %s1113 = scalar_lea.hbm %s7, %s1112
          %s1115 = sshll.u32 [#allocation11], 4
          %s1116 = int_to_ptr.vmem [resolvable:$true] %s1115
          %1118 = dma.vmem_to_hbm [thread:$0]  %s1116, 128, %s1113, [#allocation5]
        $region84: #{tpu_custom_call.1} parent=47 // pred_fallthru
          _
        // Predicated region
        $region85: #{tpu_custom_call.1} parent=47 // pred_check
          %p1119 = pneg %p224
        $region86: #{tpu_custom_call.1} parent=47 // pred_check_branch
          %1121 = sbr.rel (%p1119) target = $region88
        $region87: #{tpu_custom_call.1} parent=47 // pred_region
          %1122 = dma.done [#allocation5], 128
        $region88: #{tpu_custom_call.1} parent=47 // pred_fallthru
          _
      $region48: #{tpu_custom_call.1} parent=5 // pred_fallthru
        _
      %p1123 = scmp.le.s32.totalorder 2, %s16
      // Predicated region
      $region89: #{tpu_custom_call.1} parent=5 // pred_check
        %p1124 = pneg %p1123
      $region90: #{tpu_custom_call.1} parent=5 // pred_check_branch
        %1126 = sbr.rel (%p1124) target = $region92
      $region91: #{tpu_custom_call.1} parent=5 // pred_region
        %s1127 = ssub.s32 %s16, 2
      $region92: #{tpu_custom_call.1} parent=5 // pred_fallthru
        _
    $region6: #{tpu_custom_call.1} parent=1 // loop_footer
      %s20 = sadd.s32 1, %s16
    $region7: #{tpu_custom_call.1} parent=1 // loop_footer_branch
      %15 = sbr.rel target = $region3
    $region8: #{tpu_custom_call.1} parent=1 // loop_exit
      _
    %1128 = vsyncpa [#allocation4], 1
    %s1129 = scalar_lea.sflag [#allocation4], 1
    %1130 = vsyncpa %s1129, 1
    %1131 = vsyncpa [#allocation7], 1
    %1132 = vsyncpa [#allocation5], 1
    %s1133 = scalar_lea.sflag [#allocation5], 1
    %1134 = vsyncpa %s1133, 1

</llo_original>
